<compile_context>
chip_gen: v5e
topology: v5e:2x2
jax: 0.10.0
libtpu: 0.0.40
codegen_flags: <defaults>
</compile_context>

<pallas_src>
from functools import partial

import jax
import jax.numpy as jnp
from jax import lax
from jax.experimental import pallas as pl
from jax.experimental.pallas import tpu as pltpu


def _dqn_kernel(x_ref, h0_ref, c0_ref,
                wih_ref, whh_ref, w1_ref, w2_ref, vec_ref,
                q_ref, hn_ref, cn_ref):
    """Whole forward pass (eval mode) in one kernel invocation.

    x_ref:   (T*B, I_pad) bf16  time-major rows (row index = t*B + b)
    h0/c0:   (B, H)        f32
    wih_ref: (I_pad, 4H)   bf16  LSTM input weights, transposed, PyTorch gate order (i,f,g,o)
    whh_ref: (H, 4H)       bf16  LSTM recurrent weights, transposed
    w1_ref:  (H, F1)       bf16  fc1 weights, transposed
    w2_ref:  (F1, A_pad)   bf16  fc2 weights (transposed) with eval-mode BatchNorm folded in
    vec_ref: (3, W)        f32   row 0: b_ih+b_hh (4H) | row 1: fc1 bias (F1)
                                 row 2: BN-folded fc2 bias (A_pad)
    outputs: q (B, A_pad), h_n (B, H), c_n (B, H)  -- all f32
    """
    B, H = h0_ref.shape
    G = 4 * H
    T = x_ref.shape[0] // B
    F1 = w1_ref.shape[1]
    A_pad = w2_ref.shape[1]

    b_lstm = vec_ref[0:1, :G]
    b_fc1 = vec_ref[1:2, :F1]
    b_fc2 = vec_ref[2:3, :A_pad]

    # --- Hoisted input projection: one (T*B, I) @ (I, 4H) MXU GEMM, bias folded in. ---
    gx = jnp.dot(x_ref[...], wih_ref[...],
                 preferred_element_type=jnp.float32) + b_lstm          # (T*B, 4H) f32

    whh = whh_ref[...]
    h = h0_ref[...]
    c = c0_ref[...]

    # --- Recurrence: fully unrolled (T static & small). Per step: one small MXU push on the
    #     bf16 recurrent weights + VPU/EUP gate math; gx reads are sublane-aligned slices. ---
    for t in range(T):
        gates = gx[t * B:(t + 1) * B, :] + jnp.dot(
            h.astype(jnp.bfloat16), whh, preferred_element_type=jnp.float32)   # (B, 4H) f32
        # sigmoid via tanh: one EUP push per step instead of exp + reciprocal (two).
        sig = 0.5 * jnp.tanh(0.5 * gates) + 0.5
        tnh = jnp.tanh(gates)
        c = sig[:, H:2 * H] * c + sig[:, 0:H] * tnh[:, 2 * H:3 * H]
        h = sig[:, 3 * H:4 * H] * jnp.tanh(c)

    hn_ref[...] = h
    cn_ref[...] = c

    # --- fc1 + ReLU ---
    out = jnp.dot(h.astype(jnp.bfloat16), w1_ref[...],
                  preferred_element_type=jnp.float32) + b_fc1
    out = jnp.maximum(out, 0.0)

    # BatchNorm1d(eval) is folded into w2/b2 at param-prep time; Dropout(p=0.3) is identity
    # in eval mode.
    # TODO(synk): training-mode dropout / batch-statistics BatchNorm not implemented.

    # --- fc2 (output padded to 128 lanes -> unmasked lane-dense store, full MXU N) ---
    q_ref[...] = jnp.dot(out.astype(jnp.bfloat16), w2_ref[...],
                         preferred_element_type=jnp.float32) + b_fc2


def init_params(key, input_size, action_size, hidden_size=128):
    """Deterministic PyTorch-style uniform init (raw, unfolded, f32 parameters)."""
    ks = jax.random.split(key, 10)
    H, I, A = hidden_size, input_size, action_size
    k_lstm = 1.0 / jnp.sqrt(H)
    k_fc1 = 1.0 / jnp.sqrt(H)
    k_fc2 = 1.0 / jnp.sqrt(128.0)

    def u(k, shape, scale):
        return jax.random.uniform(k, shape, jnp.float32, -scale, scale)

    return dict(
        # LSTM weights stored transposed: (in, 4H) so every matmul is x @ W.
        wih_t=u(ks[0], (I, 4 * H), k_lstm),
        whh_t=u(ks[1], (H, 4 * H), k_lstm),
        b=u(ks[2], (1, 4 * H), k_lstm) + u(ks[3], (1, 4 * H), k_lstm),  # b_ih + b_hh
        w1_t=u(ks[4], (H, 128), k_fc1),
        b1=u(ks[5], (1, 128), k_fc1),
        gamma=1.0 + 0.1 * u(ks[6], (1, 128), 1.0),
        beta=0.1 * u(ks[7], (1, 128), 1.0),
        run_mean=jnp.zeros((1, 128), jnp.float32),
        run_var=jnp.ones((1, 128), jnp.float32),
        w2_t=u(ks[8], (128, A), k_fc2),
        b2=u(ks[9], (1, A), k_fc2),
    )


def prepare_params(params, eps=1e-5):
    """One-time param prep: BN fold into fc2, lane/sublane padding, bf16 casts, bias packing."""
    I, G = params["wih_t"].shape
    H = params["whh_t"].shape[0]
    F1, A = params["w2_t"].shape
    A_pad = -(-A // 128) * 128
    I_pad = -(-I // 8) * 8
    assert H % 8 == 0, "hidden_size must be a multiple of 8"

    # Fold eval-mode BatchNorm into fc2:
    #   ((x - mean) * rsqrt(var+eps) * gamma + beta) @ w2 + b2  ==  x @ (s[:,None]*w2) + (t@w2 + b2)
    s = params["gamma"][0] * lax.rsqrt(params["run_var"][0] + eps)     # (F1,)
    t = params["beta"][0] - params["run_mean"][0] * s                  # (F1,)
    w2_f = s[:, None] * params["w2_t"]                                 # (F1, A)
    b2_f = params["b2"][0] + t @ params["w2_t"]                        # (A,)

    # Pad fc2 out-features to a full 128-lane tile (zero columns).
    w2_p = jnp.zeros((F1, A_pad), jnp.float32).at[:, :A].set(w2_f)
    b2_p = jnp.zeros((A_pad,), jnp.float32).at[:A].set(b2_f)

    # Pad LSTM input features to the 8-sublane granularity (zero rows contribute nothing).
    wih_p = jnp.zeros((I_pad, G), jnp.float32).at[:I, :].set(params["wih_t"])

    # Pack all remaining small per-channel vectors into ONE (3, W) f32 buffer -> single DMA.
    W = max(G, F1, A_pad)
    vec = jnp.zeros((3, W), jnp.float32)
    vec = vec.at[0, :G].set(params["b"][0])
    vec = vec.at[1, :F1].set(params["b1"][0])
    vec = vec.at[2, :A_pad].set(b2_p)

    return dict(
        wih=wih_p.astype(jnp.bfloat16),
        whh=params["whh_t"].astype(jnp.bfloat16),
        w1=params["w1_t"].astype(jnp.bfloat16),
        w2=w2_p.astype(jnp.bfloat16),
        vec=vec,
    )


@partial(jax.jit, static_argnames=("action_size",))
def dqn_forward(x, prep, action_size, hidden=None):
    """x: (B, T, I) batch_first, like the PyTorch module. Returns (q, (h_n, c_n))."""
    B, T, I = x.shape
    H = prep["whh"].shape[0]
    I_pad = prep["wih"].shape[0]
    A_pad = prep["w2"].shape[1]
    A = action_size

    if hidden is None:
        h0 = jnp.zeros((B, H), jnp.float32)
        c0 = jnp.zeros((B, H), jnp.float32)
    else:
        h0 = hidden[0][0].astype(jnp.float32)
        c0 = hidden[1][0].astype(jnp.float32)

    # Pad batch to the 8-sublane granularity; padded rows are sliced off afterwards.
    B_pad = max(8, -(-B // 8) * 8)
    pad_b = B_pad - B

    # Time-major flatten + feature pad in the wrapper (free XLA relayout), passed as bf16 so
    # the kernel reads a tile-aligned 2-D (T*B, I_pad) operand and never reshapes.
    x_tm = jnp.transpose(x, (1, 0, 2))                                   # (T, B, I)
    x_tm = jnp.pad(x_tm, ((0, 0), (0, pad_b), (0, I_pad - I)))
    x_tm = x_tm.reshape(T * B_pad, I_pad).astype(jnp.bfloat16)
    h0_p = jnp.pad(h0, ((0, pad_b), (0, 0)))
    c0_p = jnp.pad(c0, ((0, pad_b), (0, 0)))

    vmem = pl.BlockSpec(memory_space=pltpu.MemorySpace.VMEM)
    q_p, h_n, c_n = pl.pallas_call(
        _dqn_kernel,
        out_shape=(
            jax.ShapeDtypeStruct((B_pad, A_pad), jnp.float32),
            jax.ShapeDtypeStruct((B_pad, H), jnp.float32),
            jax.ShapeDtypeStruct((B_pad, H), jnp.float32),
        ),
        in_specs=[vmem] * 8,
        out_specs=(vmem, vmem, vmem),
    )(x_tm, h0_p, c0_p, prep["wih"], prep["whh"], prep["w1"], prep["w2"], prep["vec"])

    q = q_p[:B, :A]
    # match PyTorch LSTM hidden shape (num_layers=1, B, H)
    return q, (h_n[:B][None], c_n[:B][None])


def _reference_forward(x, params, h0=None, c0=None):
    """Pure-JAX full-f32, unfused reference of the PyTorch module (eval mode)."""
    B, T, I = x.shape
    H = params["whh_t"].shape[0]
    h = jnp.zeros((B, H), jnp.float32) if h0 is None else h0
    c = jnp.zeros((B, H), jnp.float32) if c0 is None else c0
    for t in range(T):
        gates = x[:, t, :] @ params["wih_t"] + h @ params["whh_t"] + params["b"]
        i_g = jax.nn.sigmoid(gates[:, 0:H])
        f_g = jax.nn.sigmoid(gates[:, H:2 * H])
        g_g = jnp.tanh(gates[:, 2 * H:3 * H])
        o_g = jax.nn.sigmoid(gates[:, 3 * H:4 * H])
        c = f_g * c + i_g * g_g
        h = o_g * jnp.tanh(c)
    out = jnp.maximum(h @ params["w1_t"] + params["b1"], 0.0)
    out = (out - params["run_mean"]) * lax.rsqrt(params["run_var"] + 1e-5) \
        * params["gamma"] + params["beta"]
    q = out @ params["w2_t"] + params["b2"]
    return q, h, c


if __name__ == "__main__":
    B, T, I = 2, 8, 16        # batch, sequence length, input_size
    H, A = 32, 4              # hidden_size, action_size

    key = jax.random.PRNGKey(0)
    k_x, k_x2, k_p = jax.random.split(key, 3)
    x = jax.random.normal(k_x, (B, T, I), jnp.float32)
    params = init_params(k_p, input_size=I, action_size=A, hidden_size=H)
    prep = prepare_params(params)

    # Path 1: hidden=None (zero initial state).
    q, (h_n, c_n) = dqn_forward(x, prep, action_size=A, hidden=None)
    jax.block_until_ready(q)
    jax.block_until_ready(h_n)
    jax.block_until_ready(c_n)

    q_ref, h_ref, c_ref = _reference_forward(x, params)
    assert q.shape == (B, A) and h_n.shape == (1, B, H) and c_n.shape == (1, B, H)
    # Kernel matmuls use bf16 operands with f32 accumulation (reference is full f32),
    # so tolerance reflects bf16 MXU precision.
    TOL = dict(atol=2e-2, rtol=2e-2)
    assert jnp.allclose(q, q_ref, **TOL)
    assert jnp.allclose(h_n[0], h_ref, **TOL)
    assert jnp.allclose(c_n[0], c_ref, **TOL)

    # Path 2: provided hidden state (feed the previous (h_n, c_n) back in).
    x2 = jax.random.normal(k_x2, (B, T, I), jnp.float32)
    q2, (h2, c2) = dqn_forward(x2, prep, action_size=A, hidden=(h_n, c_n))
    jax.block_until_ready(q2)
    q2_ref, h2_ref, c2_ref = _reference_forward(x2, params, h0=h_n[0], c0=c_n[0])
    assert jnp.allclose(q2, q2_ref, **TOL)
    assert jnp.allclose(h2[0], h2_ref, **TOL)
    assert jnp.allclose(c2[0], c2_ref, **TOL)

    print("KERNEL_OK")
</pallas_src>

<mosaic_0001>
module attributes {stable_mosaic.version = 11 : i64} {
  func.func @_dqn_kernel(%arg0: memref<64x16xbf16, #tpu.memory_space<vmem>>, %arg1: memref<8x32xf32, #tpu.memory_space<vmem>>, %arg2: memref<8x32xf32, #tpu.memory_space<vmem>>, %arg3: memref<16x128xbf16, #tpu.memory_space<vmem>>, %arg4: memref<32x128xbf16, #tpu.memory_space<vmem>>, %arg5: memref<32x128xbf16, #tpu.memory_space<vmem>>, %arg6: memref<128x128xbf16, #tpu.memory_space<vmem>>, %arg7: memref<3x128xf32, #tpu.memory_space<vmem>>, %arg8: memref<8x128xf32, #tpu.memory_space<vmem>>, %arg9: memref<8x32xf32, #tpu.memory_space<vmem>>, %arg10: memref<8x32xf32, #tpu.memory_space<vmem>>) attributes {dimension_semantics = [], scalar_prefetch = 0 : i64, scratch_operands = 0 : i64, tpu.core_type = #tpu.core_type<tc>} {
    %c0 = arith.constant 0 : index
    %c0_0 = arith.constant 0 : index
    %0 = vector.load %arg7[%c0, %c0_0] : memref<3x128xf32, #tpu.memory_space<vmem>>, vector<1x128xf32>
    %c1 = arith.constant 1 : index
    %c0_1 = arith.constant 0 : index
    %1 = vector.load %arg7[%c1, %c0_1] : memref<3x128xf32, #tpu.memory_space<vmem>>, vector<1x128xf32>
    %c2 = arith.constant 2 : index
    %c0_2 = arith.constant 0 : index
    %2 = vector.load %arg7[%c2, %c0_2] : memref<3x128xf32, #tpu.memory_space<vmem>>, vector<1x128xf32>
    %c0_3 = arith.constant 0 : index
    %c0_4 = arith.constant 0 : index
    %3 = vector.load %arg0[%c0_3, %c0_4] : memref<64x16xbf16, #tpu.memory_space<vmem>>, vector<64x16xbf16>
    %c0_5 = arith.constant 0 : index
    %c0_6 = arith.constant 0 : index
    %4 = vector.load %arg3[%c0_5, %c0_6] : memref<16x128xbf16, #tpu.memory_space<vmem>>, vector<16x128xbf16>
    %cst = arith.constant dense<0.000000e+00> : vector<64x128xf32>
    %5 = tpu.matmul %3, %4, %cst {dimension_numbers = #tpu.dot_dimension_numbers<[1], [0], [0], [1], [0, 0, 1, 1], [], []>} : vector<64x16xbf16>, vector<16x128xbf16>, vector<64x128xf32> -> vector<64x128xf32>
    %6 = vector.broadcast %0 : vector<1x128xf32> to vector<64x128xf32>
    %7 = arith.addf %5, %6 : vector<64x128xf32>
    %c0_7 = arith.constant 0 : index
    %c0_8 = arith.constant 0 : index
    %8 = vector.load %arg4[%c0_7, %c0_8] : memref<32x128xbf16, #tpu.memory_space<vmem>>, vector<32x128xbf16>
    %c0_9 = arith.constant 0 : index
    %c0_10 = arith.constant 0 : index
    %9 = vector.load %arg1[%c0_9, %c0_10] : memref<8x32xf32, #tpu.memory_space<vmem>>, vector<8x32xf32>
    %c0_11 = arith.constant 0 : index
    %c0_12 = arith.constant 0 : index
    %10 = vector.load %arg2[%c0_11, %c0_12] : memref<8x32xf32, #tpu.memory_space<vmem>>, vector<8x32xf32>
    %11 = vector.extract_strided_slice %7 {offsets = [0, 0], sizes = [8, 128], strides = [1, 1]} : vector<64x128xf32> to vector<8x128xf32>
    %12 = arith.truncf %9 : vector<8x32xf32> to vector<8x32xbf16>
    %cst_13 = arith.constant dense<0.000000e+00> : vector<8x128xf32>
    %13 = tpu.matmul %12, %8, %cst_13 {dimension_numbers = #tpu.dot_dimension_numbers<[1], [0], [0], [1], [0, 0, 1, 1], [], []>} : vector<8x32xbf16>, vector<32x128xbf16>, vector<8x128xf32> -> vector<8x128xf32>
    %14 = arith.addf %11, %13 : vector<8x128xf32>
    %cst_14 = arith.constant 5.000000e-01 : f32
    %15 = vector.broadcast %cst_14 : f32 to vector<8x128xf32>
    %16 = arith.mulf %15, %14 : vector<8x128xf32>
    %17 = math.tanh %16 : vector<8x128xf32>
    %cst_15 = arith.constant 5.000000e-01 : f32
    %18 = vector.broadcast %cst_15 : f32 to vector<8x128xf32>
    %19 = arith.mulf %18, %17 : vector<8x128xf32>
    %cst_16 = arith.constant 5.000000e-01 : f32
    %20 = vector.broadcast %cst_16 : f32 to vector<8x128xf32>
    %21 = arith.addf %19, %20 : vector<8x128xf32>
    %22 = math.tanh %14 : vector<8x128xf32>
    %23 = vector.extract_strided_slice %21 {offsets = [0, 32], sizes = [8, 32], strides = [1, 1]} : vector<8x128xf32> to vector<8x32xf32>
    %24 = arith.mulf %23, %10 : vector<8x32xf32>
    %25 = vector.extract_strided_slice %21 {offsets = [0, 0], sizes = [8, 32], strides = [1, 1]} : vector<8x128xf32> to vector<8x32xf32>
    %26 = vector.extract_strided_slice %22 {offsets = [0, 64], sizes = [8, 32], strides = [1, 1]} : vector<8x128xf32> to vector<8x32xf32>
    %27 = arith.mulf %25, %26 : vector<8x32xf32>
    %28 = arith.addf %24, %27 : vector<8x32xf32>
    %29 = vector.extract_strided_slice %21 {offsets = [0, 96], sizes = [8, 32], strides = [1, 1]} : vector<8x128xf32> to vector<8x32xf32>
    %30 = math.tanh %28 : vector<8x32xf32>
    %31 = arith.mulf %29, %30 : vector<8x32xf32>
    %32 = vector.extract_strided_slice %7 {offsets = [8, 0], sizes = [8, 128], strides = [1, 1]} : vector<64x128xf32> to vector<8x128xf32>
    %33 = arith.truncf %31 : vector<8x32xf32> to vector<8x32xbf16>
    %cst_17 = arith.constant dense<0.000000e+00> : vector<8x128xf32>
    %34 = tpu.matmul %33, %8, %cst_17 {dimension_numbers = #tpu.dot_dimension_numbers<[1], [0], [0], [1], [0, 0, 1, 1], [], []>} : vector<8x32xbf16>, vector<32x128xbf16>, vector<8x128xf32> -> vector<8x128xf32>
    %35 = arith.addf %32, %34 : vector<8x128xf32>
    %cst_18 = arith.constant 5.000000e-01 : f32
    %36 = vector.broadcast %cst_18 : f32 to vector<8x128xf32>
    %37 = arith.mulf %36, %35 : vector<8x128xf32>
    %38 = math.tanh %37 : vector<8x128xf32>
    %cst_19 = arith.constant 5.000000e-01 : f32
    %39 = vector.broadcast %cst_19 : f32 to vector<8x128xf32>
    %40 = arith.mulf %39, %38 : vector<8x128xf32>
    %cst_20 = arith.constant 5.000000e-01 : f32
    %41 = vector.broadcast %cst_20 : f32 to vector<8x128xf32>
    %42 = arith.addf %40, %41 : vector<8x128xf32>
    %43 = math.tanh %35 : vector<8x128xf32>
    %44 = vector.extract_strided_slice %42 {offsets = [0, 32], sizes = [8, 32], strides = [1, 1]} : vector<8x128xf32> to vector<8x32xf32>
    %45 = arith.mulf %44, %28 : vector<8x32xf32>
    %46 = vector.extract_strided_slice %42 {offsets = [0, 0], sizes = [8, 32], strides = [1, 1]} : vector<8x128xf32> to vector<8x32xf32>
    %47 = vector.extract_strided_slice %43 {offsets = [0, 64], sizes = [8, 32], strides = [1, 1]} : vector<8x128xf32> to vector<8x32xf32>
    %48 = arith.mulf %46, %47 : vector<8x32xf32>
    %49 = arith.addf %45, %48 : vector<8x32xf32>
    %50 = vector.extract_strided_slice %42 {offsets = [0, 96], sizes = [8, 32], strides = [1, 1]} : vector<8x128xf32> to vector<8x32xf32>
    %51 = math.tanh %49 : vector<8x32xf32>
    %52 = arith.mulf %50, %51 : vector<8x32xf32>
    %53 = vector.extract_strided_slice %7 {offsets = [16, 0], sizes = [8, 128], strides = [1, 1]} : vector<64x128xf32> to vector<8x128xf32>
    %54 = arith.truncf %52 : vector<8x32xf32> to vector<8x32xbf16>
    %cst_21 = arith.constant dense<0.000000e+00> : vector<8x128xf32>
    %55 = tpu.matmul %54, %8, %cst_21 {dimension_numbers = #tpu.dot_dimension_numbers<[1], [0], [0], [1], [0, 0, 1, 1], [], []>} : vector<8x32xbf16>, vector<32x128xbf16>, vector<8x128xf32> -> vector<8x128xf32>
    %56 = arith.addf %53, %55 : vector<8x128xf32>
    %cst_22 = arith.constant 5.000000e-01 : f32
    %57 = vector.broadcast %cst_22 : f32 to vector<8x128xf32>
    %58 = arith.mulf %57, %56 : vector<8x128xf32>
    %59 = math.tanh %58 : vector<8x128xf32>
    %cst_23 = arith.constant 5.000000e-01 : f32
    %60 = vector.broadcast %cst_23 : f32 to vector<8x128xf32>
    %61 = arith.mulf %60, %59 : vector<8x128xf32>
    %cst_24 = arith.constant 5.000000e-01 : f32
    %62 = vector.broadcast %cst_24 : f32 to vector<8x128xf32>
    %63 = arith.addf %61, %62 : vector<8x128xf32>
    %64 = math.tanh %56 : vector<8x128xf32>
    %65 = vector.extract_strided_slice %63 {offsets = [0, 32], sizes = [8, 32], strides = [1, 1]} : vector<8x128xf32> to vector<8x32xf32>
    %66 = arith.mulf %65, %49 : vector<8x32xf32>
    %67 = vector.extract_strided_slice %63 {offsets = [0, 0], sizes = [8, 32], strides = [1, 1]} : vector<8x128xf32> to vector<8x32xf32>
    %68 = vector.extract_strided_slice %64 {offsets = [0, 64], sizes = [8, 32], strides = [1, 1]} : vector<8x128xf32> to vector<8x32xf32>
    %69 = arith.mulf %67, %68 : vector<8x32xf32>
    %70 = arith.addf %66, %69 : vector<8x32xf32>
    %71 = vector.extract_strided_slice %63 {offsets = [0, 96], sizes = [8, 32], strides = [1, 1]} : vector<8x128xf32> to vector<8x32xf32>
    %72 = math.tanh %70 : vector<8x32xf32>
    %73 = arith.mulf %71, %72 : vector<8x32xf32>
    %74 = vector.extract_strided_slice %7 {offsets = [24, 0], sizes = [8, 128], strides = [1, 1]} : vector<64x128xf32> to vector<8x128xf32>
    %75 = arith.truncf %73 : vector<8x32xf32> to vector<8x32xbf16>
    %cst_25 = arith.constant dense<0.000000e+00> : vector<8x128xf32>
    %76 = tpu.matmul %75, %8, %cst_25 {dimension_numbers = #tpu.dot_dimension_numbers<[1], [0], [0], [1], [0, 0, 1, 1], [], []>} : vector<8x32xbf16>, vector<32x128xbf16>, vector<8x128xf32> -> vector<8x128xf32>
    %77 = arith.addf %74, %76 : vector<8x128xf32>
    %cst_26 = arith.constant 5.000000e-01 : f32
    %78 = vector.broadcast %cst_26 : f32 to vector<8x128xf32>
    %79 = arith.mulf %78, %77 : vector<8x128xf32>
    %80 = math.tanh %79 : vector<8x128xf32>
    %cst_27 = arith.constant 5.000000e-01 : f32
    %81 = vector.broadcast %cst_27 : f32 to vector<8x128xf32>
    %82 = arith.mulf %81, %80 : vector<8x128xf32>
    %cst_28 = arith.constant 5.000000e-01 : f32
    %83 = vector.broadcast %cst_28 : f32 to vector<8x128xf32>
    %84 = arith.addf %82, %83 : vector<8x128xf32>
    %85 = math.tanh %77 : vector<8x128xf32>
    %86 = vector.extract_strided_slice %84 {offsets = [0, 32], sizes = [8, 32], strides = [1, 1]} : vector<8x128xf32> to vector<8x32xf32>
    %87 = arith.mulf %86, %70 : vector<8x32xf32>
    %88 = vector.extract_strided_slice %84 {offsets = [0, 0], sizes = [8, 32], strides = [1, 1]} : vector<8x128xf32> to vector<8x32xf32>
    %89 = vector.extract_strided_slice %85 {offsets = [0, 64], sizes = [8, 32], strides = [1, 1]} : vector<8x128xf32> to vector<8x32xf32>
    %90 = arith.mulf %88, %89 : vector<8x32xf32>
    %91 = arith.addf %87, %90 : vector<8x32xf32>
    %92 = vector.extract_strided_slice %84 {offsets = [0, 96], sizes = [8, 32], strides = [1, 1]} : vector<8x128xf32> to vector<8x32xf32>
    %93 = math.tanh %91 : vector<8x32xf32>
    %94 = arith.mulf %92, %93 : vector<8x32xf32>
    %95 = vector.extract_strided_slice %7 {offsets = [32, 0], sizes = [8, 128], strides = [1, 1]} : vector<64x128xf32> to vector<8x128xf32>
    %96 = arith.truncf %94 : vector<8x32xf32> to vector<8x32xbf16>
    %cst_29 = arith.constant dense<0.000000e+00> : vector<8x128xf32>
    %97 = tpu.matmul %96, %8, %cst_29 {dimension_numbers = #tpu.dot_dimension_numbers<[1], [0], [0], [1], [0, 0, 1, 1], [], []>} : vector<8x32xbf16>, vector<32x128xbf16>, vector<8x128xf32> -> vector<8x128xf32>
    %98 = arith.addf %95, %97 : vector<8x128xf32>
    %cst_30 = arith.constant 5.000000e-01 : f32
    %99 = vector.broadcast %cst_30 : f32 to vector<8x128xf32>
    %100 = arith.mulf %99, %98 : vector<8x128xf32>
    %101 = math.tanh %100 : vector<8x128xf32>
    %cst_31 = arith.constant 5.000000e-01 : f32
    %102 = vector.broadcast %cst_31 : f32 to vector<8x128xf32>
    %103 = arith.mulf %102, %101 : vector<8x128xf32>
    %cst_32 = arith.constant 5.000000e-01 : f32
    %104 = vector.broadcast %cst_32 : f32 to vector<8x128xf32>
    %105 = arith.addf %103, %104 : vector<8x128xf32>
    %106 = math.tanh %98 : vector<8x128xf32>
    %107 = vector.extract_strided_slice %105 {offsets = [0, 32], sizes = [8, 32], strides = [1, 1]} : vector<8x128xf32> to vector<8x32xf32>
    %108 = arith.mulf %107, %91 : vector<8x32xf32>
    %109 = vector.extract_strided_slice %105 {offsets = [0, 0], sizes = [8, 32], strides = [1, 1]} : vector<8x128xf32> to vector<8x32xf32>
    %110 = vector.extract_strided_slice %106 {offsets = [0, 64], sizes = [8, 32], strides = [1, 1]} : vector<8x128xf32> to vector<8x32xf32>
    %111 = arith.mulf %109, %110 : vector<8x32xf32>
    %112 = arith.addf %108, %111 : vector<8x32xf32>
    %113 = vector.extract_strided_slice %105 {offsets = [0, 96], sizes = [8, 32], strides = [1, 1]} : vector<8x128xf32> to vector<8x32xf32>
    %114 = math.tanh %112 : vector<8x32xf32>
    %115 = arith.mulf %113, %114 : vector<8x32xf32>
    %116 = vector.extract_strided_slice %7 {offsets = [40, 0], sizes = [8, 128], strides = [1, 1]} : vector<64x128xf32> to vector<8x128xf32>
    %117 = arith.truncf %115 : vector<8x32xf32> to vector<8x32xbf16>
    %cst_33 = arith.constant dense<0.000000e+00> : vector<8x128xf32>
    %118 = tpu.matmul %117, %8, %cst_33 {dimension_numbers = #tpu.dot_dimension_numbers<[1], [0], [0], [1], [0, 0, 1, 1], [], []>} : vector<8x32xbf16>, vector<32x128xbf16>, vector<8x128xf32> -> vector<8x128xf32>
    %119 = arith.addf %116, %118 : vector<8x128xf32>
    %cst_34 = arith.constant 5.000000e-01 : f32
    %120 = vector.broadcast %cst_34 : f32 to vector<8x128xf32>
    %121 = arith.mulf %120, %119 : vector<8x128xf32>
    %122 = math.tanh %121 : vector<8x128xf32>
    %cst_35 = arith.constant 5.000000e-01 : f32
    %123 = vector.broadcast %cst_35 : f32 to vector<8x128xf32>
    %124 = arith.mulf %123, %122 : vector<8x128xf32>
    %cst_36 = arith.constant 5.000000e-01 : f32
    %125 = vector.broadcast %cst_36 : f32 to vector<8x128xf32>
    %126 = arith.addf %124, %125 : vector<8x128xf32>
    %127 = math.tanh %119 : vector<8x128xf32>
    %128 = vector.extract_strided_slice %126 {offsets = [0, 32], sizes = [8, 32], strides = [1, 1]} : vector<8x128xf32> to vector<8x32xf32>
    %129 = arith.mulf %128, %112 : vector<8x32xf32>
    %130 = vector.extract_strided_slice %126 {offsets = [0, 0], sizes = [8, 32], strides = [1, 1]} : vector<8x128xf32> to vector<8x32xf32>
    %131 = vector.extract_strided_slice %127 {offsets = [0, 64], sizes = [8, 32], strides = [1, 1]} : vector<8x128xf32> to vector<8x32xf32>
    %132 = arith.mulf %130, %131 : vector<8x32xf32>
    %133 = arith.addf %129, %132 : vector<8x32xf32>
    %134 = vector.extract_strided_slice %126 {offsets = [0, 96], sizes = [8, 32], strides = [1, 1]} : vector<8x128xf32> to vector<8x32xf32>
    %135 = math.tanh %133 : vector<8x32xf32>
    %136 = arith.mulf %134, %135 : vector<8x32xf32>
    %137 = vector.extract_strided_slice %7 {offsets = [48, 0], sizes = [8, 128], strides = [1, 1]} : vector<64x128xf32> to vector<8x128xf32>
    %138 = arith.truncf %136 : vector<8x32xf32> to vector<8x32xbf16>
    %cst_37 = arith.constant dense<0.000000e+00> : vector<8x128xf32>
    %139 = tpu.matmul %138, %8, %cst_37 {dimension_numbers = #tpu.dot_dimension_numbers<[1], [0], [0], [1], [0, 0, 1, 1], [], []>} : vector<8x32xbf16>, vector<32x128xbf16>, vector<8x128xf32> -> vector<8x128xf32>
    %140 = arith.addf %137, %139 : vector<8x128xf32>
    %cst_38 = arith.constant 5.000000e-01 : f32
    %141 = vector.broadcast %cst_38 : f32 to vector<8x128xf32>
    %142 = arith.mulf %141, %140 : vector<8x128xf32>
    %143 = math.tanh %142 : vector<8x128xf32>
    %cst_39 = arith.constant 5.000000e-01 : f32
    %144 = vector.broadcast %cst_39 : f32 to vector<8x128xf32>
    %145 = arith.mulf %144, %143 : vector<8x128xf32>
    %cst_40 = arith.constant 5.000000e-01 : f32
    %146 = vector.broadcast %cst_40 : f32 to vector<8x128xf32>
    %147 = arith.addf %145, %146 : vector<8x128xf32>
    %148 = math.tanh %140 : vector<8x128xf32>
    %149 = vector.extract_strided_slice %147 {offsets = [0, 32], sizes = [8, 32], strides = [1, 1]} : vector<8x128xf32> to vector<8x32xf32>
    %150 = arith.mulf %149, %133 : vector<8x32xf32>
    %151 = vector.extract_strided_slice %147 {offsets = [0, 0], sizes = [8, 32], strides = [1, 1]} : vector<8x128xf32> to vector<8x32xf32>
    %152 = vector.extract_strided_slice %148 {offsets = [0, 64], sizes = [8, 32], strides = [1, 1]} : vector<8x128xf32> to vector<8x32xf32>
    %153 = arith.mulf %151, %152 : vector<8x32xf32>
    %154 = arith.addf %150, %153 : vector<8x32xf32>
    %155 = vector.extract_strided_slice %147 {offsets = [0, 96], sizes = [8, 32], strides = [1, 1]} : vector<8x128xf32> to vector<8x32xf32>
    %156 = math.tanh %154 : vector<8x32xf32>
    %157 = arith.mulf %155, %156 : vector<8x32xf32>
    %158 = vector.extract_strided_slice %7 {offsets = [56, 0], sizes = [8, 128], strides = [1, 1]} : vector<64x128xf32> to vector<8x128xf32>
    %159 = arith.truncf %157 : vector<8x32xf32> to vector<8x32xbf16>
    %cst_41 = arith.constant dense<0.000000e+00> : vector<8x128xf32>
    %160 = tpu.matmul %159, %8, %cst_41 {dimension_numbers = #tpu.dot_dimension_numbers<[1], [0], [0], [1], [0, 0, 1, 1], [], []>} : vector<8x32xbf16>, vector<32x128xbf16>, vector<8x128xf32> -> vector<8x128xf32>
    %161 = arith.addf %158, %160 : vector<8x128xf32>
    %cst_42 = arith.constant 5.000000e-01 : f32
    %162 = vector.broadcast %cst_42 : f32 to vector<8x128xf32>
    %163 = arith.mulf %162, %161 : vector<8x128xf32>
    %164 = math.tanh %163 : vector<8x128xf32>
    %cst_43 = arith.constant 5.000000e-01 : f32
    %165 = vector.broadcast %cst_43 : f32 to vector<8x128xf32>
    %166 = arith.mulf %165, %164 : vector<8x128xf32>
    %cst_44 = arith.constant 5.000000e-01 : f32
    %167 = vector.broadcast %cst_44 : f32 to vector<8x128xf32>
    %168 = arith.addf %166, %167 : vector<8x128xf32>
    %169 = math.tanh %161 : vector<8x128xf32>
    %170 = vector.extract_strided_slice %168 {offsets = [0, 32], sizes = [8, 32], strides = [1, 1]} : vector<8x128xf32> to vector<8x32xf32>
    %171 = arith.mulf %170, %154 : vector<8x32xf32>
    %172 = vector.extract_strided_slice %168 {offsets = [0, 0], sizes = [8, 32], strides = [1, 1]} : vector<8x128xf32> to vector<8x32xf32>
    %173 = vector.extract_strided_slice %169 {offsets = [0, 64], sizes = [8, 32], strides = [1, 1]} : vector<8x128xf32> to vector<8x32xf32>
    %174 = arith.mulf %172, %173 : vector<8x32xf32>
    %175 = arith.addf %171, %174 : vector<8x32xf32>
    %176 = vector.extract_strided_slice %168 {offsets = [0, 96], sizes = [8, 32], strides = [1, 1]} : vector<8x128xf32> to vector<8x32xf32>
    %177 = math.tanh %175 : vector<8x32xf32>
    %178 = arith.mulf %176, %177 : vector<8x32xf32>
    %c0_45 = arith.constant 0 : index
    %c0_46 = arith.constant 0 : index
    %179 = vector.load %arg9[%c0_45, %c0_46] : memref<8x32xf32, #tpu.memory_space<vmem>>, vector<8x32xf32>
    tpu.vector_store %arg9[%c0_45, %c0_46], %178 {strides = array<i32>} : memref<8x32xf32, #tpu.memory_space<vmem>>, vector<8x32xf32>,
    %c0_47 = arith.constant 0 : index
    %c0_48 = arith.constant 0 : index
    %180 = vector.load %arg10[%c0_47, %c0_48] : memref<8x32xf32, #tpu.memory_space<vmem>>, vector<8x32xf32>
    tpu.vector_store %arg10[%c0_47, %c0_48], %175 {strides = array<i32>} : memref<8x32xf32, #tpu.memory_space<vmem>>, vector<8x32xf32>,
    %181 = arith.truncf %178 : vector<8x32xf32> to vector<8x32xbf16>
    %c0_49 = arith.constant 0 : index
    %c0_50 = arith.constant 0 : index
    %182 = vector.load %arg5[%c0_49, %c0_50] : memref<32x128xbf16, #tpu.memory_space<vmem>>, vector<32x128xbf16>
    %cst_51 = arith.constant dense<0.000000e+00> : vector<8x128xf32>
    %183 = tpu.matmul %181, %182, %cst_51 {dimension_numbers = #tpu.dot_dimension_numbers<[1], [0], [0], [1], [0, 0, 1, 1], [], []>} : vector<8x32xbf16>, vector<32x128xbf16>, vector<8x128xf32> -> vector<8x128xf32>
    %184 = vector.broadcast %1 : vector<1x128xf32> to vector<8x128xf32>
    %185 = arith.addf %183, %184 : vector<8x128xf32>
    %cst_52 = arith.constant 0.000000e+00 : f32
    %186 = vector.broadcast %cst_52 : f32 to vector<8x128xf32>
    %187 = arith.maximumf %185, %186 : vector<8x128xf32>
    %188 = arith.truncf %187 : vector<8x128xf32> to vector<8x128xbf16>
    %c0_53 = arith.constant 0 : index
    %c0_54 = arith.constant 0 : index
    %189 = vector.load %arg6[%c0_53, %c0_54] : memref<128x128xbf16, #tpu.memory_space<vmem>>, vector<128x128xbf16>
    %cst_55 = arith.constant dense<0.000000e+00> : vector<8x128xf32>
    %190 = tpu.matmul %188, %189, %cst_55 {dimension_numbers = #tpu.dot_dimension_numbers<[1], [0], [0], [1], [0, 0, 1, 1], [], []>} : vector<8x128xbf16>, vector<128x128xbf16>, vector<8x128xf32> -> vector<8x128xf32>
    %191 = vector.broadcast %2 : vector<1x128xf32> to vector<8x128xf32>
    %192 = arith.addf %190, %191 : vector<8x128xf32>
    %c0_56 = arith.constant 0 : index
    %c0_57 = arith.constant 0 : index
    %193 = vector.load %arg8[%c0_56, %c0_57] : memref<8x128xf32, #tpu.memory_space<vmem>>, vector<8x128xf32>
    tpu.vector_store %arg8[%c0_56, %c0_57], %192 {strides = array<i32>} : memref<8x128xf32, #tpu.memory_space<vmem>>, vector<8x128xf32>,
    return
  }
}

</mosaic_0001>

<llo_original>
// kernel: dqn_forward.1
$region0: #{dqn_forward.1}
  #allocation0 [shape = 'u32[]', space=smem, size = 0x4, offset = 0x4, fixed_abs, tag = 'smem constant byte address 0x4 - core index']
  #allocation1 [shape = 'u32[72,128]{1,0:T(1,128)}', space=vmem, size = 0x9000, scoped, tag = 'internal scratch']
  %s0 = inlined_call_operand.vmem [shape: bf16[64,16], index: 0, kind: input, shape index: {}]
  %s1 = inlined_call_operand.vmem [shape: f32[8,32], index: 1, kind: input, shape index: {}, may-alias: {1,2}]
  %s2 = inlined_call_operand.vmem [shape: f32[8,32], index: 2, kind: input, shape index: {}, may-alias: {1,2}]
  %s3 = inlined_call_operand.hbm [shape: bf16[16,128], index: 3, kind: input, shape index: {}]
  %s4 = inlined_call_operand.vmem [shape: bf16[32,128], index: 4, kind: input, shape index: {}]
  %s5 = inlined_call_operand.vmem [shape: bf16[32,128], index: 5, kind: input, shape index: {}]
  %s6 = inlined_call_operand.vmem [shape: bf16[128,128], index: 6, kind: input, shape index: {}]
  %s7 = inlined_call_operand.hbm [shape: f32[3,128], index: 7, kind: input, shape index: {}]
  %s8 = inlined_call_operand.vmem [shape: f32[8,128], index: 8, kind: output, shape index: {0}]
  %s9 = inlined_call_operand.vmem [shape: f32[8,32], index: 9, kind: output, shape index: {1}]
  %s10 = inlined_call_operand.vmem [shape: f32[8,32], index: 10, kind: output, shape index: {2}]
  %11 = xla_tuple %s8, %s9, %s10
  %s12 = sld [smem:[#allocation0]]
  $region66: #{dqn_forward.1} parent=0
    _
  %s14 = ssub.s32 1, %s12
  %s15 = scalar_select 0, %s14, %s12
  $region1: #{dqn_forward.1} parent=0
    #allocation2 [shape = 'u8[4096]{0}', space=vmem, size = 0x1000, scoped, tag = 'input window, operand 3, single buffered']
    #allocation3 [shape = 's32[1]{0}', space=sflag, size = 0x4, scoped, tag = 'scoped memory for dqn_forward.1']
    #allocation4 [shape = 'u8[2048]{0}', space=vmem, size = 0x800, scoped, tag = 'input window, operand 7, single buffered']
    #allocation5 [shape = 's32[1]{0}', space=sflag, size = 0x4, scoped, tag = 'scoped memory for dqn_forward.1']
    %16 = vsyncpa [#allocation3], 0
    %17 = vsyncpa [#allocation5], 0
    // Predicated region
    $region2: #{dqn_forward.1} parent=1 // pred_check
      _
    $region3: #{dqn_forward.1} parent=1 // pred_check_branch
      %19 = sbr.rel (0) target = $region5
    $region4: #{dqn_forward.1} parent=1 // pred_region
      _
    $region5: #{dqn_forward.1} parent=1 // pred_fallthru
      _
    // Predicated region
    $region6: #{dqn_forward.1} parent=1 // pred_check
      _
    $region7: #{dqn_forward.1} parent=1 // pred_check_branch
      %21 = sbr.rel (0) target = $region9
    $region8: #{dqn_forward.1} parent=1 // pred_region
      _
    $region9: #{dqn_forward.1} parent=1 // pred_fallthru
      _
    // Predicated region
    $region10: #{dqn_forward.1} parent=1 // pred_check
      _
    $region11: #{dqn_forward.1} parent=1 // pred_check_branch
      %23 = sbr.rel (0) target = $region13
    $region12: #{dqn_forward.1} parent=1 // pred_region
      _
    $region13: #{dqn_forward.1} parent=1 // pred_fallthru
      _
    // Predicated region
    $region14: #{dqn_forward.1} parent=1 // pred_check
      _
    $region15: #{dqn_forward.1} parent=1 // pred_check_branch
      %25 = sbr.rel (0) target = $region17
    $region16: #{dqn_forward.1} parent=1 // pred_region
      %27 = vsyncadd [#allocation3], 0
      %s28 = sshll.u32 %s3, 4
      %s29 = int_to_ptr.hbm [resolvable:$true] %s28
      %s30 = sshll.u32 [#allocation2], 4
      %s31 = int_to_ptr.vmem [resolvable:$true] %s30
      %36 = dma.hbm_to_vmem [thread:$0]  %s29, 128, %s31, [#allocation3], 64, 64, 4
    $region17: #{dqn_forward.1} parent=1 // pred_fallthru
      _
    // Predicated region
    $region18: #{dqn_forward.1} parent=1 // pred_check
      _
    $region19: #{dqn_forward.1} parent=1 // pred_check_branch
      %38 = sbr.rel (0) target = $region21
    $region20: #{dqn_forward.1} parent=1 // pred_region
      _
    $region21: #{dqn_forward.1} parent=1 // pred_fallthru
      _
    // Predicated region
    $region22: #{dqn_forward.1} parent=1 // pred_check
      _
    $region23: #{dqn_forward.1} parent=1 // pred_check_branch
      %40 = sbr.rel (0) target = $region25
    $region24: #{dqn_forward.1} parent=1 // pred_region
      _
    $region25: #{dqn_forward.1} parent=1 // pred_fallthru
      _
    // Predicated region
    $region26: #{dqn_forward.1} parent=1 // pred_check
      _
    $region27: #{dqn_forward.1} parent=1 // pred_check_branch
      %42 = sbr.rel (0) target = $region29
    $region28: #{dqn_forward.1} parent=1 // pred_region
      _
    $region29: #{dqn_forward.1} parent=1 // pred_fallthru
      _
    // Predicated region
    $region30: #{dqn_forward.1} parent=1 // pred_check
      _
    $region31: #{dqn_forward.1} parent=1 // pred_check_branch
      %44 = sbr.rel (0) target = $region33
    $region32: #{dqn_forward.1} parent=1 // pred_region
      %46 = vsyncadd [#allocation5], 0
      %s48 = sshll.u32 %s7, 4
      %s49 = int_to_ptr.hbm [resolvable:$true] %s48
      %s50 = sshll.u32 [#allocation4], 4
      %s51 = int_to_ptr.vmem [resolvable:$true] %s50
      %53 = dma.hbm_to_vmem [thread:$0]  %s49, 64, %s51, [#allocation5]
    $region33: #{dqn_forward.1} parent=1 // pred_fallthru
      _
    // Predicated region
    $region34: #{dqn_forward.1} parent=1 // pred_check
      _
    $region35: #{dqn_forward.1} parent=1 // pred_check_branch
      %55 = sbr.rel (0) target = $region37
    $region36: #{dqn_forward.1} parent=1 // pred_region
      %57 = dma.done [#allocation3], 128
    $region37: #{dqn_forward.1} parent=1 // pred_fallthru
      _
    // Predicated region
    $region38: #{dqn_forward.1} parent=1 // pred_check
      _
    $region39: #{dqn_forward.1} parent=1 // pred_check_branch
      %59 = sbr.rel (0) target = $region41
    $region40: #{dqn_forward.1} parent=1 // pred_region
      %61 = dma.done [#allocation5], 64
    $region41: #{dqn_forward.1} parent=1 // pred_fallthru
      _
    %v63 = vld [vmem:[#allocation4] sm:$0x1]
    %v64 = vld [vmem:[#allocation4 + $0x1] sm:$0x1]
    %v65 = vld [vmem:[#allocation4 + $0x2] sm:$0x1]
    %v66 = vld [vmem:[%s0] sm:$0xf]
    %v67 = vld [vmem:[%s0 + $0x4] sm:$0xf]
    %v68 = vld [vmem:[%s0 + $0x8] sm:$0xf]
    %v69 = vld [vmem:[%s0 + $0xc] sm:$0xf]
    %v70 = vld [vmem:[%s0 + $0x10] sm:$0xf]
    %v71 = vld [vmem:[%s0 + $0x14] sm:$0xf]
    %v72 = vld [vmem:[%s0 + $0x18] sm:$0xf]
    %v73 = vld [vmem:[%s0 + $0x1c] sm:$0xf]
    %v74 = vld [vmem:[#allocation2] sm:$0xf]
    %v75 = vld [vmem:[#allocation2 + $0x4] sm:$0xf]
    %v76 = vperm.slane %v63, 0
    %v85 = vunpack.c.l.b16 %v66
    %v86 = vunpack.c.l.b16 %v67
    %v87 = vunpack.c.l.b16 %v68
    %v88 = vunpack.c.l.b16 %v69
    %v89 = vunpack.c.l.b16 %v70
    %v90 = vunpack.c.l.b16 %v71
    %v91 = vunpack.c.l.b16 %v72
    %v92 = vunpack.c.l.b16 %v73
    %v93 = vpack.c.b16 %v86, %v85
    %v94 = vpack.c.b16 %v88, %v87
    %v95 = vpack.c.b16 %v90, %v89
    %v96 = vpack.c.b16 %v92, %v91
    %v99 = vunpack.c.l.b16 %v74
    %v100 = vunpack.c.l.b16 %v75
    %v101 = vpack.c.b16 %v100, %v99
    %vm103 = vcmask 130048
    %v105 = vsel %vm103, %v93, 0
    %v108 = vsel %vm103, %v94, 0
    %v111 = vsel %vm103, %v95, 0
    %v114 = vsel %vm103, %v96, 0
    %116 = vmatpush.bf16.msra.mxu0 0
    %117 = vmatpush.bf16.msra.mxu0 0
    %118 = vmatpush.bf16.msra.mxu0 0
    %119 = vmatpush.bf16.msra.mxu0 0
    %120 = vmatpush.bf16.msra.mxu0 0
    %121 = vmatpush.bf16.msra.mxu0 0
    %122 = vmatpush.bf16.msra.mxu0 0
    %123 = vmatpush.bf16.msra.mxu0 %v101
    %124 = vmatmul.bf16.gmra.mxu0 %v105
    %v125 = vpop.f32.mrf.mxu0
    %v126 = vadd.f32 %v76, %v125
    %v127 = vpop.f32.mrf.mxu0
    %v128 = vadd.f32 %v76, %v127
    %129 = vmatmul.bf16.gmra.mxu0 %v108
    %v130 = vpop.f32.mrf.mxu0
    %v131 = vadd.f32 %v76, %v130
    %v132 = vpop.f32.mrf.mxu0
    %v133 = vadd.f32 %v76, %v132
    %134 = vmatmul.bf16.gmra.mxu0 %v111
    %v135 = vpop.f32.mrf.mxu0
    %v136 = vadd.f32 %v76, %v135
    %v137 = vpop.f32.mrf.mxu0
    %v138 = vadd.f32 %v76, %v137
    %139 = vmatmul.bf16.gmra.mxu0 %v114
    %v140 = vpop.f32.mrf.mxu0
    %v141 = vadd.f32 %v76, %v140
    %v142 = vpop.f32.mrf.mxu0
    %v143 = vadd.f32 %v76, %v142
    %144 = vdwg.mxu0
    %v145 = vld [vmem:[%s4] sm:$0xf]
    %v146 = vld [vmem:[%s4 + $0x4] sm:$0xf]
    %v147 = vld [vmem:[%s4 + $0x8] sm:$0xf]
    %v148 = vld [vmem:[%s4 + $0xc] sm:$0xf]
    %v149 = vld [vmem:[%s1] sm:$0xff]
    %v150 = vld [vmem:[%s2] sm:$0xff]
    %v151 = vpack.c.bf16 %v149, %v149
    %v156 = vunpack.c.l.b16 %v145
    %v157 = vunpack.c.l.b16 %v146
    %v158 = vunpack.c.l.b16 %v147
    %v159 = vunpack.c.l.b16 %v148
    %v160 = vpack.c.b16 %v157, %v156
    %v161 = vpack.c.b16 %v159, %v158
    %vm164 = vcmask 261120
    %v166 = vsel %vm164, %v151, 0
    %168 = vmatpush.bf16.msra.mxu0 0
    %169 = vmatpush.bf16.msra.mxu0 0
    %170 = vmatpush.bf16.msra.mxu0 0
    %171 = vmatpush.bf16.msra.mxu0 0
    %172 = vmatpush.bf16.msra.mxu0 0
    %173 = vmatpush.bf16.msra.mxu0 0
    %174 = vmatpush.bf16.msra.mxu0 %v161
    %175 = vmatpush.bf16.msra.mxu0 %v160
    %176 = vmatmul.bf16.gmra.mxu0 %v166
    %v177 = vpop.f32.mrf.mxu0
    %v178 = vadd.f32 0.0, %v177
    %v179 = vpop.f32.mrf.mxu0
    %180 = vdwg.mxu0
    %v181 = vadd.f32 %v126, %v178
    %v182 = vmul.f32 %v181, 0.5
    %v183 = vtanh.pop %v182
    %v184 = vmul.f32 %v183, 0.5
    %v185 = vadd.f32 %v184, 0.5
    %v186 = vtanh.pop %v181
    %188 = vrot.lane.b32.xlu0 %v150, 32
    %v189 = vpop.permute.xlu0 %188
    %v191 = vmul.f32 %v185, %v189
    %193 = vrot.lane.b32.xlu0 %v186, 64
    %v194 = vpop.permute.xlu0 %193
    %v196 = vmul.f32 %v185, %v194
    %198 = vrot.lane.b32.xlu0 %v196, 32
    %v199 = vpop.permute.xlu0 %198
    %v201 = vadd.f32 %v191, %v199
    %v202 = vtanh.pop %v201
    %204 = vrot.lane.b32.xlu0 %v202, 64
    %v205 = vpop.permute.xlu0 %204
    %v207 = vmul.f32 %v185, %v205
    %v208 = vpack.c.bf16 %v207, %v207
    %210 = vrot.lane.b32.xlu0 %v208, 32
    %v211 = vpop.permute.xlu0 %210
    %v213 = vsel %vm164, %v211, 0
    %215 = vmatpush.bf16.msra.mxu0 0
    %216 = vmatpush.bf16.msra.mxu0 0
    %217 = vmatpush.bf16.msra.mxu0 0
    %218 = vmatpush.bf16.msra.mxu0 0
    %219 = vmatpush.bf16.msra.mxu0 0
    %220 = vmatpush.bf16.msra.mxu0 0
    %221 = vmatpush.bf16.msra.mxu0 %v161
    %222 = vmatpush.bf16.msra.mxu0 %v160
    %223 = vmatmul.bf16.gmra.mxu0 %v213
    %v224 = vpop.f32.mrf.mxu0
    %v225 = vadd.f32 0.0, %v224
    %v226 = vpop.f32.mrf.mxu0
    %227 = vdwg.mxu0
    %v228 = vadd.f32 %v128, %v225
    %v229 = vmul.f32 %v228, 0.5
    %v230 = vtanh.pop %v229
    %v231 = vmul.f32 %v230, 0.5
    %v232 = vadd.f32 %v231, 0.5
    %v233 = vtanh.pop %v228
    %v234 = vmul.f32 %v232, %v201
    %236 = vrot.lane.b32.xlu0 %v233, 64
    %v237 = vpop.permute.xlu0 %236
    %v239 = vmul.f32 %v232, %v237
    %241 = vrot.lane.b32.xlu0 %v239, 32
    %v242 = vpop.permute.xlu0 %241
    %v244 = vadd.f32 %v234, %v242
    %v245 = vtanh.pop %v244
    %247 = vrot.lane.b32.xlu0 %v245, 64
    %v248 = vpop.permute.xlu0 %247
    %v250 = vmul.f32 %v232, %v248
    %v251 = vpack.c.bf16 %v250, %v250
    %253 = vrot.lane.b32.xlu0 %v251, 32
    %v254 = vpop.permute.xlu0 %253
    %v256 = vsel %vm164, %v254, 0
    %258 = vmatpush.bf16.msra.mxu0 0
    %259 = vmatpush.bf16.msra.mxu0 0
    %260 = vmatpush.bf16.msra.mxu0 0
    %261 = vmatpush.bf16.msra.mxu0 0
    %262 = vmatpush.bf16.msra.mxu0 0
    %263 = vmatpush.bf16.msra.mxu0 0
    %264 = vmatpush.bf16.msra.mxu0 %v161
    %265 = vmatpush.bf16.msra.mxu0 %v160
    %266 = vmatmul.bf16.gmra.mxu0 %v256
    %v267 = vpop.f32.mrf.mxu0
    %v268 = vadd.f32 0.0, %v267
    %v269 = vpop.f32.mrf.mxu0
    %270 = vdwg.mxu0
    %v271 = vadd.f32 %v131, %v268
    %v272 = vmul.f32 %v271, 0.5
    %v273 = vtanh.pop %v272
    %v274 = vmul.f32 %v273, 0.5
    %v275 = vadd.f32 %v274, 0.5
    %v276 = vtanh.pop %v271
    %v277 = vmul.f32 %v275, %v244
    %279 = vrot.lane.b32.xlu0 %v276, 64
    %v280 = vpop.permute.xlu0 %279
    %v282 = vmul.f32 %v275, %v280
    %284 = vrot.lane.b32.xlu0 %v282, 32
    %v285 = vpop.permute.xlu0 %284
    %v287 = vadd.f32 %v277, %v285
    %v288 = vtanh.pop %v287
    %290 = vrot.lane.b32.xlu0 %v288, 64
    %v291 = vpop.permute.xlu0 %290
    %v293 = vmul.f32 %v275, %v291
    %v294 = vpack.c.bf16 %v293, %v293
    %296 = vrot.lane.b32.xlu0 %v294, 32
    %v297 = vpop.permute.xlu0 %296
    %v299 = vsel %vm164, %v297, 0
    %301 = vmatpush.bf16.msra.mxu0 0
    %302 = vmatpush.bf16.msra.mxu0 0
    %303 = vmatpush.bf16.msra.mxu0 0
    %304 = vmatpush.bf16.msra.mxu0 0
    %305 = vmatpush.bf16.msra.mxu0 0
    %306 = vmatpush.bf16.msra.mxu0 0
    %307 = vmatpush.bf16.msra.mxu0 %v161
    %308 = vmatpush.bf16.msra.mxu0 %v160
    %309 = vmatmul.bf16.gmra.mxu0 %v299
    %v310 = vpop.f32.mrf.mxu0
    %v311 = vadd.f32 0.0, %v310
    %v312 = vpop.f32.mrf.mxu0
    %313 = vdwg.mxu0
    %v314 = vadd.f32 %v133, %v311
    %v315 = vmul.f32 %v314, 0.5
    %v316 = vtanh.pop %v315
    %v317 = vmul.f32 %v316, 0.5
    %v318 = vadd.f32 %v317, 0.5
    %v319 = vtanh.pop %v314
    %v320 = vmul.f32 %v318, %v287
    %322 = vrot.lane.b32.xlu0 %v319, 64
    %v323 = vpop.permute.xlu0 %322
    %v325 = vmul.f32 %v318, %v323
    %327 = vrot.lane.b32.xlu0 %v325, 32
    %v328 = vpop.permute.xlu0 %327
    %v330 = vadd.f32 %v320, %v328
    %v331 = vtanh.pop %v330
    %333 = vrot.lane.b32.xlu0 %v331, 64
    %v334 = vpop.permute.xlu0 %333
    %v336 = vmul.f32 %v318, %v334
    %v337 = vpack.c.bf16 %v336, %v336
    %339 = vrot.lane.b32.xlu0 %v337, 32
    %v340 = vpop.permute.xlu0 %339
    %v342 = vsel %vm164, %v340, 0
    %344 = vmatpush.bf16.msra.mxu0 0
    %345 = vmatpush.bf16.msra.mxu0 0
    %346 = vmatpush.bf16.msra.mxu0 0
    %347 = vmatpush.bf16.msra.mxu0 0
    %348 = vmatpush.bf16.msra.mxu0 0
    %349 = vmatpush.bf16.msra.mxu0 0
    %350 = vmatpush.bf16.msra.mxu0 %v161
    %351 = vmatpush.bf16.msra.mxu0 %v160
    %352 = vmatmul.bf16.gmra.mxu0 %v342
    %v353 = vpop.f32.mrf.mxu0
    %v354 = vadd.f32 0.0, %v353
    %v355 = vpop.f32.mrf.mxu0
    %356 = vdwg.mxu0
    %v357 = vadd.f32 %v136, %v354
    %v358 = vmul.f32 %v357, 0.5
    %v359 = vtanh.pop %v358
    %v360 = vmul.f32 %v359, 0.5
    %v361 = vadd.f32 %v360, 0.5
    %v362 = vtanh.pop %v357
    %v363 = vmul.f32 %v361, %v330
    %365 = vrot.lane.b32.xlu0 %v362, 64
    %v366 = vpop.permute.xlu0 %365
    %v368 = vmul.f32 %v361, %v366
    %370 = vrot.lane.b32.xlu0 %v368, 32
    %v371 = vpop.permute.xlu0 %370
    %v373 = vadd.f32 %v363, %v371
    %v374 = vtanh.pop %v373
    %376 = vrot.lane.b32.xlu0 %v374, 64
    %v377 = vpop.permute.xlu0 %376
    %v379 = vmul.f32 %v361, %v377
    %v380 = vpack.c.bf16 %v379, %v379
    %382 = vrot.lane.b32.xlu0 %v380, 32
    %v383 = vpop.permute.xlu0 %382
    %v385 = vsel %vm164, %v383, 0
    %387 = vmatpush.bf16.msra.mxu0 0
    %388 = vmatpush.bf16.msra.mxu0 0
    %389 = vmatpush.bf16.msra.mxu0 0
    %390 = vmatpush.bf16.msra.mxu0 0
    %391 = vmatpush.bf16.msra.mxu0 0
    %392 = vmatpush.bf16.msra.mxu0 0
    %393 = vmatpush.bf16.msra.mxu0 %v161
    %394 = vmatpush.bf16.msra.mxu0 %v160
    %395 = vmatmul.bf16.gmra.mxu0 %v385
    %v396 = vpop.f32.mrf.mxu0
    %v397 = vadd.f32 0.0, %v396
    %v398 = vpop.f32.mrf.mxu0
    %399 = vdwg.mxu0
    %v400 = vadd.f32 %v138, %v397
    %v401 = vmul.f32 %v400, 0.5
    %v402 = vtanh.pop %v401
    %v403 = vmul.f32 %v402, 0.5
    %v404 = vadd.f32 %v403, 0.5
    %v405 = vtanh.pop %v400
    %v406 = vmul.f32 %v404, %v373
    %408 = vrot.lane.b32.xlu0 %v405, 64
    %v409 = vpop.permute.xlu0 %408
    %v411 = vmul.f32 %v404, %v409
    %413 = vrot.lane.b32.xlu0 %v411, 32
    %v414 = vpop.permute.xlu0 %413
    %v416 = vadd.f32 %v406, %v414
    %v417 = vtanh.pop %v416
    %419 = vrot.lane.b32.xlu0 %v417, 64
    %v420 = vpop.permute.xlu0 %419
    %v422 = vmul.f32 %v404, %v420
    %v423 = vpack.c.bf16 %v422, %v422
    %425 = vrot.lane.b32.xlu0 %v423, 32
    %v426 = vpop.permute.xlu0 %425
    %v428 = vsel %vm164, %v426, 0
    %430 = vmatpush.bf16.msra.mxu0 0
    %431 = vmatpush.bf16.msra.mxu0 0
    %432 = vmatpush.bf16.msra.mxu0 0
    %433 = vmatpush.bf16.msra.mxu0 0
    %434 = vmatpush.bf16.msra.mxu0 0
    %435 = vmatpush.bf16.msra.mxu0 0
    %436 = vmatpush.bf16.msra.mxu0 %v161
    %437 = vmatpush.bf16.msra.mxu0 %v160
    %438 = vmatmul.bf16.gmra.mxu0 %v428
    %v439 = vpop.f32.mrf.mxu0
    %v440 = vadd.f32 0.0, %v439
    %v441 = vpop.f32.mrf.mxu0
    %442 = vdwg.mxu0
    %v443 = vadd.f32 %v141, %v440
    %v444 = vmul.f32 %v443, 0.5
    %v445 = vtanh.pop %v444
    %v446 = vmul.f32 %v445, 0.5
    %v447 = vadd.f32 %v446, 0.5
    %v448 = vtanh.pop %v443
    %v449 = vmul.f32 %v447, %v416
    %451 = vrot.lane.b32.xlu0 %v448, 64
    %v452 = vpop.permute.xlu0 %451
    %v454 = vmul.f32 %v447, %v452
    %456 = vrot.lane.b32.xlu0 %v454, 32
    %v457 = vpop.permute.xlu0 %456
    %v459 = vadd.f32 %v449, %v457
    %v460 = vtanh.pop %v459
    %462 = vrot.lane.b32.xlu0 %v460, 64
    %v463 = vpop.permute.xlu0 %462
    %v465 = vmul.f32 %v447, %v463
    %v466 = vpack.c.bf16 %v465, %v465
    %468 = vrot.lane.b32.xlu0 %v466, 32
    %v469 = vpop.permute.xlu0 %468
    %v471 = vsel %vm164, %v469, 0
    %473 = vmatpush.bf16.msra.mxu0 0
    %474 = vmatpush.bf16.msra.mxu0 0
    %475 = vmatpush.bf16.msra.mxu0 0
    %476 = vmatpush.bf16.msra.mxu0 0
    %477 = vmatpush.bf16.msra.mxu0 0
    %478 = vmatpush.bf16.msra.mxu0 0
    %479 = vmatpush.bf16.msra.mxu0 %v161
    %480 = vmatpush.bf16.msra.mxu0 %v160
    %481 = vmatmul.bf16.gmra.mxu0 %v471
    %v482 = vpop.f32.mrf.mxu0
    %v483 = vadd.f32 0.0, %v482
    %v484 = vpop.f32.mrf.mxu0
    %485 = vdwg.mxu0
    %v486 = vadd.f32 %v143, %v483
    %v487 = vmul.f32 %v486, 0.5
    %v488 = vtanh.pop %v487
    %v489 = vmul.f32 %v488, 0.5
    %v490 = vadd.f32 %v489, 0.5
    %v491 = vtanh.pop %v486
    %v492 = vmul.f32 %v490, %v459
    %494 = vrot.lane.b32.xlu0 %v491, 64
    %v495 = vpop.permute.xlu0 %494
    %v497 = vmul.f32 %v490, %v495
    %499 = vrot.lane.b32.xlu0 %v497, 32
    %v500 = vpop.permute.xlu0 %499
    %v502 = vadd.f32 %v492, %v500
    %v503 = vtanh.pop %v502
    %505 = vrot.lane.b32.xlu0 %v503, 64
    %v506 = vpop.permute.xlu0 %505
    %v508 = vmul.f32 %v490, %v506
    %510 = vrot.lane.b32.xlu0 %v508, 32
    %v511 = vpop.permute.xlu0 %510
    %513 = vst.msk [vmem:[%s9] sm:$0xff] %vm164, %v511
    %515 = vrot.lane.b32.xlu0 %v502, 96
    %v516 = vpop.permute.xlu0 %515
    %518 = vst.msk [vmem:[%s10] sm:$0xff] %vm164, %v516
    %v519 = vpack.c.bf16 %v508, %v508
    %v520 = vld [vmem:[%s5] sm:$0xf]
    %v521 = vld [vmem:[%s5 + $0x4] sm:$0xf]
    %v522 = vld [vmem:[%s5 + $0x8] sm:$0xf]
    %v523 = vld [vmem:[%s5 + $0xc] sm:$0xf]
    %v524 = vperm.slane %v64, 0
    %526 = vrot.lane.b32.xlu0 %v519, 32
    %v527 = vpop.permute.xlu0 %526
    %v532 = vunpack.c.l.b16 %v520
    %v533 = vunpack.c.l.b16 %v521
    %v534 = vunpack.c.l.b16 %v522
    %v535 = vunpack.c.l.b16 %v523
    %v536 = vpack.c.b16 %v533, %v532
    %v537 = vpack.c.b16 %v535, %v534
    %v541 = vsel %vm164, %v527, 0
    %543 = vmatpush.bf16.msra.mxu0 0
    %544 = vmatpush.bf16.msra.mxu0 0
    %545 = vmatpush.bf16.msra.mxu0 0
    %546 = vmatpush.bf16.msra.mxu0 0
    %547 = vmatpush.bf16.msra.mxu0 0
    %548 = vmatpush.bf16.msra.mxu0 0
    %549 = vmatpush.bf16.msra.mxu0 %v537
    %550 = vmatpush.bf16.msra.mxu0 %v536
    %551 = vmatmul.bf16.gmra.mxu0 %v541
    %v552 = vpop.f32.mrf.mxu0
    %v553 = vadd.f32 %v524, %v552
    %v554 = vpop.f32.mrf.mxu0
    %555 = vdwg.mxu0
    %v556 = vmax.f32 %v553, 0.0
    %v557 = vpack.c.bf16 %v556, %v556
    %v558 = vld [vmem:[%s6] sm:$0xf]
    %v559 = vld [vmem:[%s6 + $0x4] sm:$0xf]
    %v560 = vld [vmem:[%s6 + $0x8] sm:$0xf]
    %v561 = vld [vmem:[%s6 + $0xc] sm:$0xf]
    %v562 = vld [vmem:[%s6 + $0x10] sm:$0xf]
    %v563 = vld [vmem:[%s6 + $0x14] sm:$0xf]
    %v564 = vld [vmem:[%s6 + $0x18] sm:$0xf]
    %v565 = vld [vmem:[%s6 + $0x1c] sm:$0xf]
    %v566 = vld [vmem:[%s6 + $0x20] sm:$0xf]
    %v567 = vld [vmem:[%s6 + $0x24] sm:$0xf]
    %v568 = vld [vmem:[%s6 + $0x28] sm:$0xf]
    %v569 = vld [vmem:[%s6 + $0x2c] sm:$0xf]
    %v570 = vld [vmem:[%s6 + $0x30] sm:$0xf]
    %v571 = vld [vmem:[%s6 + $0x34] sm:$0xf]
    %v572 = vld [vmem:[%s6 + $0x38] sm:$0xf]
    %v573 = vld [vmem:[%s6 + $0x3c] sm:$0xf]
    %v574 = vperm.slane %v65, 0
    %v591 = vunpack.c.l.b16 %v558
    %v592 = vunpack.c.l.b16 %v559
    %v593 = vunpack.c.l.b16 %v560
    %v594 = vunpack.c.l.b16 %v561
    %v595 = vunpack.c.l.b16 %v562
    %v596 = vunpack.c.l.b16 %v563
    %v597 = vunpack.c.l.b16 %v564
    %v598 = vunpack.c.l.b16 %v565
    %v599 = vunpack.c.l.b16 %v566
    %v600 = vunpack.c.l.b16 %v567
    %v601 = vunpack.c.l.b16 %v568
    %v602 = vunpack.c.l.b16 %v569
    %v603 = vunpack.c.l.b16 %v570
    %v604 = vunpack.c.l.b16 %v571
    %v605 = vunpack.c.l.b16 %v572
    %v606 = vunpack.c.l.b16 %v573
    %v607 = vpack.c.b16 %v592, %v591
    %v608 = vpack.c.b16 %v594, %v593
    %v609 = vpack.c.b16 %v596, %v595
    %v610 = vpack.c.b16 %v598, %v597
    %v611 = vpack.c.b16 %v600, %v599
    %v612 = vpack.c.b16 %v602, %v601
    %v613 = vpack.c.b16 %v604, %v603
    %v614 = vpack.c.b16 %v606, %v605
    %623 = vmatpush.bf16.msra.mxu0 %v614
    %624 = vmatpush.bf16.msra.mxu0 %v613
    %625 = vmatpush.bf16.msra.mxu0 %v612
    %626 = vmatpush.bf16.msra.mxu0 %v611
    %627 = vmatpush.bf16.msra.mxu0 %v610
    %628 = vmatpush.bf16.msra.mxu0 %v609
    %629 = vmatpush.bf16.msra.mxu0 %v608
    %630 = vmatpush.bf16.msra.mxu0 %v607
    %631 = vmatmul.bf16.gmra.mxu0 %v557
    %v632 = vpop.f32.mrf.mxu0
    %v633 = vadd.f32 %v574, %v632
    %v634 = vpop.f32.mrf.mxu0
    %635 = vdwg.mxu0
    %636 = vst [vmem:[%s8] sm:$0xff] %v633
    // Predicated region
    $region42: #{dqn_forward.1} parent=1 // pred_check
      _
    $region43: #{dqn_forward.1} parent=1 // pred_check_branch
      %638 = sbr.rel (0) target = $region45
    $region44: #{dqn_forward.1} parent=1 // pred_region
      _
    $region45: #{dqn_forward.1} parent=1 // pred_fallthru
      _
    // Predicated region
    $region46: #{dqn_forward.1} parent=1 // pred_check
      _
    $region47: #{dqn_forward.1} parent=1 // pred_check_branch
      %640 = sbr.rel (0) target = $region49
    $region48: #{dqn_forward.1} parent=1 // pred_region
      _
    $region49: #{dqn_forward.1} parent=1 // pred_fallthru
      _
    // Predicated region
    $region50: #{dqn_forward.1} parent=1 // pred_check
      _
    $region51: #{dqn_forward.1} parent=1 // pred_check_branch
      %642 = sbr.rel (0) target = $region53
    $region52: #{dqn_forward.1} parent=1 // pred_region
      _
    $region53: #{dqn_forward.1} parent=1 // pred_fallthru
      _
    // Predicated region
    $region54: #{dqn_forward.1} parent=1 // pred_check
      _
    $region55: #{dqn_forward.1} parent=1 // pred_check_branch
      %644 = sbr.rel (0) target = $region57
    $region56: #{dqn_forward.1} parent=1 // pred_region
      _
    $region57: #{dqn_forward.1} parent=1 // pred_fallthru
      _
    // Predicated region
    $region58: #{dqn_forward.1} parent=1 // pred_check
      _
    $region59: #{dqn_forward.1} parent=1 // pred_check_branch
      %646 = sbr.rel (0) target = $region61
    $region60: #{dqn_forward.1} parent=1 // pred_region
      _
    $region61: #{dqn_forward.1} parent=1 // pred_fallthru
      _
    // Predicated region
    $region62: #{dqn_forward.1} parent=1 // pred_check
      _
    $region63: #{dqn_forward.1} parent=1 // pred_check_branch
      %648 = sbr.rel (0) target = $region65
    $region64: #{dqn_forward.1} parent=1 // pred_region
      _
    $region65: #{dqn_forward.1} parent=1 // pred_fallthru
      _
    %649 = vsyncpa [#allocation3], 1
    %650 = vsyncpa [#allocation5], 1

</llo_original>
